<compile_context>
chip_gen: v7x
topology: tpu7x:2x2x1
jax: 0.10.0
libtpu: 0.0.40
codegen_flags: <defaults>
</compile_context>

<pallas_src>
import numpy as np
import jax
import jax.numpy as jnp
from jax.experimental import pallas as pl
from jax.experimental.pallas import tpu as pltpu


def _round_up(n, m):
    return ((n + m - 1) // m) * m


def _orthogonal(key, rows, cols, dtype=jnp.float32):
    """Deterministic orthogonal init (same semantics as torch.nn.init.orthogonal_)."""
    n, m = max(rows, cols), min(rows, cols)
    a = jax.random.normal(key, (n, m), dtype=jnp.float32)
    q, r = jnp.linalg.qr(a)
    d = jnp.diag(r)
    sign = jnp.where(d == 0, 1.0, jnp.sign(d))  # avoid zeroing a column when diag(R)==0
    q = q * sign[None, :]
    if rows < cols:
        q = q.T
    return q.astype(dtype)


def _mlp_kernel(x_ref, w1_ref, b1_ref, w2_ref, b2_ref, o_ref):
    # x arrives f32 straight from HBM; cast to the weight dtype on the VPU (no extra HBM pass).
    x = x_ref[...].astype(w1_ref.dtype)
    # hidden = tanh(x @ W1 + b1): bf16 MXU operands, f32 accumulation + activation.
    # TODO(synk): if a bundle dump shows the single EUP slot binding, replace jnp.tanh with a
    # VPU rational approximation (4 VALU slots); exp + approx-reciprocal would NOT unbind EUP.
    h = jnp.tanh(
        jnp.dot(x, w1_ref[...], preferred_element_type=jnp.float32) + b1_ref[...]
    )
    # out = sigmoid(h @ W2 + b2)
    z = (
        jnp.dot(h.astype(w2_ref.dtype), w2_ref[...], preferred_element_type=jnp.float32)
        + b2_ref[...]
    )
    o_ref[...] = jax.nn.sigmoid(z).astype(o_ref.dtype)


def prepare_nn_prescriptor_params(w1, b1, w2, b2, *, compute_dtype=jnp.bfloat16):
    """Transpose / pad / cast the Linear parameters ONCE; reuse the result across forwards.

    w1: (hidden, in_size)  torch nn.Linear.weight layout
    b1: (hidden,)
    w2: (out_size, hidden)
    b2: (out_size,)

    The hidden dim is zero-padded to a lane multiple (128). Padding is exact: the padded
    hidden units see tanh(0 + 0) = 0 and the matching (zero) W2 rows contribute nothing.
    """
    hidden, in_size = w1.shape
    out_size = w2.shape[0]
    hid_p = _round_up(hidden, 128)

    w1_t = jnp.zeros((in_size, hid_p), compute_dtype)
    w1_t = w1_t.at[:, :hidden].set(w1.T.astype(compute_dtype))
    w2_t = jnp.zeros((hid_p, out_size), compute_dtype)
    w2_t = w2_t.at[:hidden, :].set(w2.T.astype(compute_dtype))
    b1_p = jnp.zeros((1, hid_p), jnp.float32).at[0, :hidden].set(b1.astype(jnp.float32))
    b2_p = b2.astype(jnp.float32).reshape(1, out_size)
    # TODO(synk): on v7x, storing W1/W2 as fp8 (with f32 accumulation) would halve resident
    # weight VMEM if accuracy allows.

    return {
        "w1_t": w1_t, "b1": b1_p, "w2_t": w2_t, "b2": b2_p,
        "in_size": in_size, "hidden": hidden, "hid_p": hid_p, "out_size": out_size,
    }


def _resident_spec(shape):
    """BlockSpec for a grid-constant operand: fetched once, single-buffered (no 2x VMEM)."""
    try:
        return pl.BlockSpec(shape, lambda i: (0, 0), pipeline_mode=pl.Buffered(1))
    except TypeError:  # older Pallas without pipeline_mode: fall back to default buffering
        return pl.BlockSpec(shape, lambda i: (0, 0))


def nn_prescriptor_forward(x, params, *, max_tile_rows=512, out_dtype=jnp.bfloat16):
    """Forward pass of NNPrescriptor: sigmoid(tanh(x @ W1.T + b1) @ W2.T + b2).

    x: (B, in_size) float32.  Returns (B, out_size) in `out_dtype`, values in [0, 1].
    """
    B, in_size = x.shape
    assert in_size == params["in_size"], (in_size, params["in_size"])
    hid_p, out_size = params["hid_p"], params["out_size"]
    w_itemsize = jnp.dtype(params["w1_t"].dtype).itemsize
    out_itemsize = jnp.dtype(out_dtype).itemsize

    # Row tile: multiple of 16 (bf16 packs 2 rows per sublane).  Give the grid >= 2 steps when
    # the batch allows it so multi-TensorCore parts can shard the batch axis.
    tm = min(max_tile_rows, _round_up(B, 16))
    if B > 16 and pl.cdiv(B, tm) < 2:
        tm = _round_up(pl.cdiv(B, 2), 16)

    weight_bytes = (in_size * hid_p + hid_p * out_size) * w_itemsize + (hid_p + out_size) * 4

    def vmem_needed(rows):
        return (
            weight_bytes                                 # resident weights/biases (1 buffer)
            + 2 * rows * in_size * x.dtype.itemsize      # double-buffered x tiles
            + 2 * rows * out_size * out_itemsize         # double-buffered out tiles
            + rows * hid_p * (4 + w_itemsize)            # f32 h + bf16 copy for 2nd matmul
            + rows * out_size * 4                        # f32 z
        )

    # Keep the footprint comfortably inside v7x's 64 MiB physical VMEM.
    while vmem_needed(tm) > 48 * 1024 * 1024 and tm > 16:
        tm = max(16, _round_up(tm // 2, 16))
    # TODO(synk): if weight_bytes alone exceeds ~24 MiB (very large hidden on v7x), tile the
    # hidden dim with an f32 accumulator instead of keeping both full matrices VMEM-resident.

    vmem_limit = int(min(64 * 1024 * 1024, max(32 * 1024 * 1024, 1.5 * vmem_needed(tm))))

    grid = (pl.cdiv(B, tm),)

    cost = pl.CostEstimate(
        flops=2 * B * (in_size * hid_p + hid_p * out_size),
        transcendentals=B * (hid_p + out_size),
        bytes_accessed=(B * in_size * x.dtype.itemsize
                        + weight_bytes
                        + B * out_size * out_itemsize),
    )

    # TODO(synk): on v7x use pltpu.CORE_PARALLEL (or an explicit core_map) for the batch axis;
    # plain "parallel" is a safe no-op on single-TC v5e/v6e but does not reliably split on v7x.
    return pl.pallas_call(
        _mlp_kernel,
        out_shape=jax.ShapeDtypeStruct((B, out_size), out_dtype),
        grid=grid,
        in_specs=[
            pl.BlockSpec((tm, in_size), lambda i: (i, 0)),   # x: tiled over batch, pipelined
            _resident_spec((in_size, hid_p)),                # W1^T: VMEM-resident
            _resident_spec((1, hid_p)),                      # b1
            _resident_spec((hid_p, out_size)),               # W2^T
            _resident_spec((1, out_size)),                   # b2
        ],
        out_specs=pl.BlockSpec((tm, out_size), lambda i: (i, 0)),
        compiler_params=pltpu.CompilerParams(
            dimension_semantics=("parallel",),
            vmem_limit_bytes=vmem_limit,
        ),
        cost_estimate=cost,
    )(x, params["w1_t"], params["b1"], params["w2_t"], params["b2"])


def reference_forward(x, w1, b1, w2, b2):
    h = jnp.tanh(x @ w1.T + b1)
    return jax.nn.sigmoid(h @ w2.T + b2)


if __name__ == "__main__":
    # Small shapes consistent with the module's forward.
    batch, in_size, hidden_size, out_size = 2, 16, 32, 8
    # TODO(synk): at these tiny sizes a single instance is pure launch overhead; batch many
    # prescriptor instances (or many rows) into one call to amortize it.

    key = jax.random.PRNGKey(0)
    kx, kw1, kw2 = jax.random.split(key, 3)

    # Parameters: orthogonal weights in torch Linear layout (out, in), bias filled with 0.01.
    w1 = _orthogonal(kw1, hidden_size, in_size)   # (hidden, in)
    w2 = _orthogonal(kw2, out_size, hidden_size)  # (out, hidden)
    b1 = jnp.full((hidden_size,), 0.01, dtype=jnp.float32)
    b2 = jnp.full((out_size,), 0.01, dtype=jnp.float32)

    x = jax.random.normal(kx, (batch, in_size), dtype=jnp.float32)

    # Hoisted/cached parameter prep: pay the transpose/pad/cast exactly once.
    params = prepare_nn_prescriptor_params(w1, b1, w2, b2)

    out = nn_prescriptor_forward(x, params)
    out = jax.block_until_ready(out)

    out_f32 = np.asarray(out.astype(jnp.float32))
    expected = np.asarray(reference_forward(x, w1, b1, w2, b2))
    # bf16 matmul operands + bf16 output (f32 accumulation) -> loose-but-tight tolerance.
    np.testing.assert_allclose(out_f32, expected, rtol=2e-2, atol=2e-2)
    assert out.shape == (batch, out_size)
    assert float(out_f32.min()) >= 0.0 and float(out_f32.max()) <= 1.0

    print("KERNEL_OK")
</pallas_src>

<mosaic_0001>
module attributes {stable_mosaic.version = 11 : i64} {
  func.func @_mlp_kernel(%arg0: i32, %arg1: memref<16x16xf32, #tpu.memory_space<vmem>>, %arg2: memref<16x128xbf16, #tpu.memory_space<vmem>>, %arg3: memref<1x128xf32, #tpu.memory_space<vmem>>, %arg4: memref<128x8xbf16, #tpu.memory_space<vmem>>, %arg5: memref<1x8xf32, #tpu.memory_space<vmem>>, %arg6: memref<16x8xbf16, #tpu.memory_space<vmem>>) attributes {dimension_semantics = [#tpu.dimension_semantics<parallel>], iteration_bounds = array<i64: 1>, scalar_prefetch = 0 : i64, scratch_operands = 0 : i64, tpu.core_type = #tpu.core_type<tc>, window_params = [{transform_indices = @transform_0, window_bounds = array<i64: 16, 16>}, {pipeline_mode = #tpu.pipeline_mode<synchronous>, transform_indices = @transform_1, window_bounds = array<i64: 16, 128>}, {pipeline_mode = #tpu.pipeline_mode<synchronous>, transform_indices = @transform_2, window_bounds = array<i64: 1, 128>}, {pipeline_mode = #tpu.pipeline_mode<synchronous>, transform_indices = @transform_3, window_bounds = array<i64: 128, 8>}, {pipeline_mode = #tpu.pipeline_mode<synchronous>, transform_indices = @transform_4, window_bounds = array<i64: 1, 8>}, {transform_indices = @transform_5, window_bounds = array<i64: 16, 8>}]} {
    %c0 = arith.constant 0 : index
    %c0_0 = arith.constant 0 : index
    %0 = vector.load %arg1[%c0, %c0_0] : memref<16x16xf32, #tpu.memory_space<vmem>>, vector<16x16xf32>
    %1 = arith.truncf %0 : vector<16x16xf32> to vector<16x16xbf16>
    %c0_1 = arith.constant 0 : index
    %c0_2 = arith.constant 0 : index
    %2 = vector.load %arg2[%c0_1, %c0_2] : memref<16x128xbf16, #tpu.memory_space<vmem>>, vector<16x128xbf16>
    %cst = arith.constant dense<0.000000e+00> : vector<16x128xf32>
    %3 = tpu.matmul %1, %2, %cst {dimension_numbers = #tpu.dot_dimension_numbers<[1], [0], [0], [1], [0, 0, 1, 1], [], []>} : vector<16x16xbf16>, vector<16x128xbf16>, vector<16x128xf32> -> vector<16x128xf32>
    %c0_3 = arith.constant 0 : index
    %c0_4 = arith.constant 0 : index
    %4 = vector.load %arg3[%c0_3, %c0_4] : memref<1x128xf32, #tpu.memory_space<vmem>>, vector<1x128xf32>
    %5 = vector.broadcast %4 : vector<1x128xf32> to vector<16x128xf32>
    %6 = arith.addf %3, %5 : vector<16x128xf32>
    %7 = math.tanh %6 : vector<16x128xf32>
    %8 = arith.truncf %7 : vector<16x128xf32> to vector<16x128xbf16>
    %c0_5 = arith.constant 0 : index
    %c0_6 = arith.constant 0 : index
    %9 = vector.load %arg4[%c0_5, %c0_6] : memref<128x8xbf16, #tpu.memory_space<vmem>>, vector<128x8xbf16>
    %cst_7 = arith.constant dense<0.000000e+00> : vector<16x8xf32>
    %10 = tpu.matmul %8, %9, %cst_7 {dimension_numbers = #tpu.dot_dimension_numbers<[1], [0], [0], [1], [0, 0, 1, 1], [], []>} : vector<16x128xbf16>, vector<128x8xbf16>, vector<16x8xf32> -> vector<16x8xf32>
    %c0_8 = arith.constant 0 : index
    %c0_9 = arith.constant 0 : index
    %11 = vector.load %arg5[%c0_8, %c0_9] : memref<1x8xf32, #tpu.memory_space<vmem>>, vector<1x8xf32>
    %12 = vector.broadcast %11 : vector<1x8xf32> to vector<16x8xf32>
    %13 = arith.addf %10, %12 : vector<16x8xf32>
    %14 = arith.negf %13 : vector<16x8xf32>
    %15 = math.exp %14 : vector<16x8xf32>
    %cst_10 = arith.constant 1.000000e+00 : f32
    %16 = vector.broadcast %cst_10 : f32 to vector<16x8xf32>
    %17 = arith.addf %16, %15 : vector<16x8xf32>
    %18 = arith.divf %16, %17 : vector<16x8xf32>
    %19 = arith.truncf %18 : vector<16x8xf32> to vector<16x8xbf16>
    %c0_11 = arith.constant 0 : index
    %c0_12 = arith.constant 0 : index
    %20 = vector.load %arg6[%c0_11, %c0_12] : memref<16x8xbf16, #tpu.memory_space<vmem>>, vector<16x8xbf16>
    tpu.vector_store %arg6[%c0_11, %c0_12], %19 {strides = array<i32>} : memref<16x8xbf16, #tpu.memory_space<vmem>>, vector<16x8xbf16>,
    return
  }
  func.func @transform_0(%arg0: i32) -> (i32, i32) {
    %c0_i32 = arith.constant 0 : i32
    %c0_i32_0 = arith.constant 0 : i32
    return %arg0, %c0_i32 : i32, i32
  }
  func.func @transform_1(%arg0: i32) -> (i32, i32) {
    %c0_i32 = arith.constant 0 : i32
    %c0_i32_0 = arith.constant 0 : i32
    %c0_i32_1 = arith.constant 0 : i32
    return %c0_i32, %c0_i32_0 : i32, i32
  }
  func.func @transform_2(%arg0: i32) -> (i32, i32) {
    %c0_i32 = arith.constant 0 : i32
    %c0_i32_0 = arith.constant 0 : i32
    %c0_i32_1 = arith.constant 0 : i32
    return %c0_i32, %c0_i32_0 : i32, i32
  }
  func.func @transform_3(%arg0: i32) -> (i32, i32) {
    %c0_i32 = arith.constant 0 : i32
    %c0_i32_0 = arith.constant 0 : i32
    %c0_i32_1 = arith.constant 0 : i32
    return %c0_i32, %c0_i32_0 : i32, i32
  }
  func.func @transform_4(%arg0: i32) -> (i32, i32) {
    %c0_i32 = arith.constant 0 : i32
    %c0_i32_0 = arith.constant 0 : i32
    %c0_i32_1 = arith.constant 0 : i32
    return %c0_i32, %c0_i32_0 : i32, i32
  }
  func.func @transform_5(%arg0: i32) -> (i32, i32) {
    %c0_i32 = arith.constant 0 : i32
    %c0_i32_0 = arith.constant 0 : i32
    return %arg0, %c0_i32 : i32, i32
  }
}

</mosaic_0001>

<llo_original>
// kernel: tpu_custom_call.1
$region0: #{tpu_custom_call.1}
  #allocation0 [shape = 'u32[]', space=smem, size = 0x4, offset = 0x4, fixed_abs, tag = 'smem constant byte address 0x4 - core index']
  #allocation1 [shape = 'u32[144,128]{1,0:T(1,128)}', space=vmem, size = 0x12000, scoped, tag = 'internal scratch']
  %s0 = inlined_call_operand.vmem [shape: f32[2,16], index: 0, kind: input, shape index: {}]
  %s1 = inlined_call_operand.vmem [shape: bf16[16,128], index: 1, kind: input, shape index: {}]
  %s2 = inlined_call_operand.vmem [shape: f32[1,128], index: 2, kind: input, shape index: {}]
  %s3 = inlined_call_operand.vmem [shape: bf16[128,8], index: 3, kind: input, shape index: {}]
  %s4 = inlined_call_operand.vmem [shape: f32[1,8], index: 4, kind: input, shape index: {}]
  %s5 = inlined_call_operand.hbm [shape: bf16[2,8], index: 5, kind: output, shape index: {}]
  %s6 = sld [smem:[#allocation0]]
  $region30: #{tpu_custom_call.1} parent=0
    _
  %s8 = ssub.s32 1, %s6
  %s9 = scalar_select 0, %s8, %s6
  $region1: #{tpu_custom_call.1} parent=0
    #allocation2 [shape = 'u8[4096]{0}', space=vmem, size = 0x1000, scoped, tag = 'output window, operand 0, single buffered']
    #allocation3 [shape = 's32[1]{0}', space=sflag, size = 0x4, scoped, tag = 'scoped memory for tpu_custom_call.1']
    %10 = vsyncpa [#allocation3], 0
    // Predicated region
    $region2: #{tpu_custom_call.1} parent=1 // pred_check
      _
    $region3: #{tpu_custom_call.1} parent=1 // pred_check_branch
      %12 = sbr.rel (0) target = $region5
    $region4: #{tpu_custom_call.1} parent=1 // pred_region
      _
    $region5: #{tpu_custom_call.1} parent=1 // pred_fallthru
      _
    // Predicated region
    $region6: #{tpu_custom_call.1} parent=1 // pred_check
      _
    $region7: #{tpu_custom_call.1} parent=1 // pred_check_branch
      %14 = sbr.rel (0) target = $region9
    $region8: #{tpu_custom_call.1} parent=1 // pred_region
      _
    $region9: #{tpu_custom_call.1} parent=1 // pred_fallthru
      _
    // Predicated region
    $region10: #{tpu_custom_call.1} parent=1 // pred_check
      _
    $region11: #{tpu_custom_call.1} parent=1 // pred_check_branch
      %16 = sbr.rel (0) target = $region13
    $region12: #{tpu_custom_call.1} parent=1 // pred_region
      _
    $region13: #{tpu_custom_call.1} parent=1 // pred_fallthru
      _
    // Predicated region
    $region14: #{tpu_custom_call.1} parent=1 // pred_check
      _
    $region15: #{tpu_custom_call.1} parent=1 // pred_check_branch
      %18 = sbr.rel (0) target = $region17
    $region16: #{tpu_custom_call.1} parent=1 // pred_region
      _
    $region17: #{tpu_custom_call.1} parent=1 // pred_fallthru
      _
    // Predicated region
    $region18: #{tpu_custom_call.1} parent=1 // pred_check
      _
    $region19: #{tpu_custom_call.1} parent=1 // pred_check_branch
      %20 = sbr.rel (0) target = $region21
    $region20: #{tpu_custom_call.1} parent=1 // pred_region
      _
    $region21: #{tpu_custom_call.1} parent=1 // pred_fallthru
      _
    %v22 = vld [vmem:[%s0] sm:$0xff]
    %v23 = vld [vmem:[%s0 + $0x8] sm:$0xff]
    %v24 = vpack.c.bf16 %v23, %v22
    %v25 = vld [vmem:[%s1] sm:$0xf]
    %v26 = vld [vmem:[%s1 + $0x4] sm:$0xf]
    %v27 = vld [vmem:[%s2] sm:$0x1]
    %v29 = vlaneseq
    %v30 = vshrl.u32 %v29, 7
    %v31 = vsub.s32 0, %v30
    %v32 = vrot.slane %v27, %v31
    %v36 = vunpack.c.l.b16 %v25
    %v37 = vunpack.c.l.b16 %v26
    %v38 = vpack.c.b16 %v37, %v36
    %vm40 = vcmask 130048
    %v42 = vsel %vm40, %v24, 0
    %44 = vmatprep.subr.bf16.mxu0 0
    %45 = vmatpush1.bf16.msra.mxu0 %v38
    %46 = vmatprep.subr.bf16.mxu0 0
    %47 = vmatpush1.bf16.msra.mxu0 0
    %48 = vmatprep.subr.bf16.mxu0 0
    %49 = vmatpush1.bf16.msra.mxu0 0
    %50 = vmatprep.subr.bf16.mxu0 0
    %51 = vmatpush1.bf16.msra.mxu0 0
    %52 = vmatprep.subr.bf16.mxu0 0
    %53 = vmatpush1.bf16.msra.mxu0 0
    %54 = vmatprep.subr.bf16.mxu0 0
    %55 = vmatpush1.bf16.msra.mxu0 0
    %56 = vmatprep.subr.bf16.mxu0 0
    %57 = vmatpush1.bf16.msra.mxu0 0
    %58 = vmatprep.subr.bf16.mxu0 0
    %59 = vmatpush1.bf16.msra.mxu0 0
    %60 = vmatprep.subr.bf16.mxu0 0
    %61 = vmatpush1.bf16.msra.mxu0 0
    %62 = vmatprep.subr.bf16.mxu0 0
    %63 = vmatpush1.bf16.msra.mxu0 0
    %64 = vmatprep.subr.bf16.mxu0 0
    %65 = vmatpush1.bf16.msra.mxu0 0
    %66 = vmatprep.subr.bf16.mxu0 0
    %67 = vmatpush1.bf16.msra.mxu0 0
    %68 = vmatprep.subr.bf16.mxu0 0
    %69 = vmatpush1.bf16.msra.mxu0 0
    %70 = vmatprep.subr.bf16.mxu0 0
    %71 = vmatpush1.bf16.msra.mxu0 0
    %72 = vmatprep.subr.bf16.mxu0 0
    %73 = vmatpush1.bf16.msra.mxu0 0
    %74 = vmatprep.subr.bf16.mxu0 0
    %75 = vmatpush1.bf16.msra.mxu0 0
    %76 = vmatprep.mubr.bf16.mxu0 0
    %77 = vmatmul.mubr.bf16.gmra.mrb[0].mxu0 %v42
    %v78 = vpop.f32.mrb[0].mxu0
    %v79 = vadd.f32 %v32, %v78
    %v80 = vpop.f32.mrb[0].mxu0
    %v81 = vpop.f32.mrb[0].mxu0
    %v82 = vadd.f32 %v32, %v81
    %v83 = vpop.f32.mrb[0].mxu0
    %84 = vdwg.mxu0
    %v85 = vtanh.pop %v79
    %v86 = vtanh.pop %v82
    %v87 = vpack.c.bf16 %v86, %v85
    %v88 = vld [vmem:[%s3] sm:$0xf]
    %v89 = vld [vmem:[%s3 + $0x4] sm:$0xf]
    %v90 = vld [vmem:[%s3 + $0x8] sm:$0xf]
    %v91 = vld [vmem:[%s3 + $0xc] sm:$0xf]
    %v92 = vld [vmem:[%s3 + $0x10] sm:$0xf]
    %v93 = vld [vmem:[%s3 + $0x14] sm:$0xf]
    %v94 = vld [vmem:[%s3 + $0x18] sm:$0xf]
    %v95 = vld [vmem:[%s3 + $0x1c] sm:$0xf]
    %v96 = vld [vmem:[%s3 + $0x20] sm:$0xf]
    %v97 = vld [vmem:[%s3 + $0x24] sm:$0xf]
    %v98 = vld [vmem:[%s3 + $0x28] sm:$0xf]
    %v99 = vld [vmem:[%s3 + $0x2c] sm:$0xf]
    %v100 = vld [vmem:[%s3 + $0x30] sm:$0xf]
    %v101 = vld [vmem:[%s3 + $0x34] sm:$0xf]
    %v102 = vld [vmem:[%s3 + $0x38] sm:$0xf]
    %v103 = vld [vmem:[%s3 + $0x3c] sm:$0xf]
    %v104 = vld [vmem:[%s4] sm:$0x1]
    %v106 = vlaneseq
    %v107 = vshrl.u32 %v106, 7
    %v108 = vsub.s32 0, %v107
    %v109 = vrot.slane %v104, %v108
    %v127 = vunpack.c.l.b16 %v88
    %v128 = vunpack.c.l.b16 %v89
    %v129 = vunpack.c.l.b16 %v90
    %v130 = vunpack.c.l.b16 %v91
    %v131 = vunpack.c.l.b16 %v92
    %v132 = vunpack.c.l.b16 %v93
    %v133 = vunpack.c.l.b16 %v94
    %v134 = vunpack.c.l.b16 %v95
    %v135 = vunpack.c.l.b16 %v96
    %v136 = vunpack.c.l.b16 %v97
    %v137 = vunpack.c.l.b16 %v98
    %v138 = vunpack.c.l.b16 %v99
    %v139 = vunpack.c.l.b16 %v100
    %v140 = vunpack.c.l.b16 %v101
    %v141 = vunpack.c.l.b16 %v102
    %v142 = vunpack.c.l.b16 %v103
    %v143 = vpack.c.b16 %v128, %v127
    %v144 = vpack.c.b16 %v130, %v129
    %v145 = vpack.c.b16 %v132, %v131
    %v146 = vpack.c.b16 %v134, %v133
    %v147 = vpack.c.b16 %v136, %v135
    %v148 = vpack.c.b16 %v138, %v137
    %v149 = vpack.c.b16 %v140, %v139
    %v150 = vpack.c.b16 %v142, %v141
    %159 = vmatprep.subr.bf16.mxu0 0
    %160 = vmatpush1.bf16.msra.mxu0 %v143
    %161 = vmatprep.subr.bf16.mxu0 0
    %162 = vmatpush1.bf16.msra.mxu0 %v144
    %163 = vmatprep.subr.bf16.mxu0 0
    %164 = vmatpush1.bf16.msra.mxu0 %v145
    %165 = vmatprep.subr.bf16.mxu0 0
    %166 = vmatpush1.bf16.msra.mxu0 %v146
    %167 = vmatprep.subr.bf16.mxu0 0
    %168 = vmatpush1.bf16.msra.mxu0 %v147
    %169 = vmatprep.subr.bf16.mxu0 0
    %170 = vmatpush1.bf16.msra.mxu0 %v148
    %171 = vmatprep.subr.bf16.mxu0 0
    %172 = vmatpush1.bf16.msra.mxu0 %v149
    %173 = vmatprep.subr.bf16.mxu0 0
    %174 = vmatpush1.bf16.msra.mxu0 %v150
    %175 = vmatprep.subr.bf16.mxu0 0
    %176 = vmatpush1.bf16.msra.mxu0 0
    %177 = vmatprep.subr.bf16.mxu0 0
    %178 = vmatpush1.bf16.msra.mxu0 0
    %179 = vmatprep.subr.bf16.mxu0 0
    %180 = vmatpush1.bf16.msra.mxu0 0
    %181 = vmatprep.subr.bf16.mxu0 0
    %182 = vmatpush1.bf16.msra.mxu0 0
    %183 = vmatprep.subr.bf16.mxu0 0
    %184 = vmatpush1.bf16.msra.mxu0 0
    %185 = vmatprep.subr.bf16.mxu0 0
    %186 = vmatpush1.bf16.msra.mxu0 0
    %187 = vmatprep.subr.bf16.mxu0 0
    %188 = vmatpush1.bf16.msra.mxu0 0
    %189 = vmatprep.subr.bf16.mxu0 0
    %190 = vmatpush1.bf16.msra.mxu0 0
    %191 = vmatprep.mubr.bf16.mxu0 0
    %192 = vmatmul.mubr.bf16.gmra.mrb[0].mxu0 %v87
    %v193 = vpop.f32.mrb[0].mxu0
    %v194 = vadd.f32 %v109, %v193
    %v195 = vpop.f32.mrb[0].mxu0
    %v196 = vpop.f32.mrb[0].mxu0
    %v197 = vadd.f32 %v109, %v196
    %v198 = vpop.f32.mrb[0].mxu0
    %199 = vdwg.mxu0
    %v200 = vxor.u32 %v194, 2147483648
    %v201 = vxor.u32 %v197, 2147483648
    %v202 = vmul.f32 %v200, 1.442695
    %v203 = vpow.pop %v202
    %v204 = vmul.f32 %v201, 1.442695
    %v205 = vpow.pop %v204
    %v206 = vadd.f32 %v203, 1.0
    %v207 = vadd.f32 %v205, 1.0
    %v208 = vrcp.pop %v206
    %v209 = vmul.f32 1.0, %v208
    %v210 = vrcp.pop %v207
    %v211 = vmul.f32 1.0, %v210
    %v212 = vpack.c.bf16 %v211, %v209
    %v214 = vcombine.high %v212, %v212
    %v216 = vunpack.c.l.s4 1966171168
    %v217 = vunpack.c.0.s8 %v216
    %v218 = vlaneseq
    %v219 = vshrl.u32 %v218, 7
    %v220 = vsub.s32 %v217, %v219
    %v221 = vrot.slane %v212, %v220
    %v223 = vunpack.c.l.s4 1966171168
    %v224 = vunpack.c.0.s8 %v223
    %v225 = vlaneseq
    %v226 = vshrl.u32 %v225, 7
    %v227 = vsub.s32 %v224, %v226
    %v228 = vrot.slane %v214, %v227
    %v229 = vcombine.high %v221, %v221
    %v230 = vcombine.high %v228, %v228
    %v232 = vunpack.c.l.s4 1966171168
    %v233 = vunpack.c.0.s8 %v232
    %v234 = vlaneseq
    %v235 = vshrl.u32 %v234, 7
    %v236 = vsub.s32 %v233, %v235
    %v237 = vrot.slane %v221, %v236
    %v239 = vunpack.c.l.s4 1966171168
    %v240 = vunpack.c.0.s8 %v239
    %v241 = vlaneseq
    %v242 = vshrl.u32 %v241, 7
    %v243 = vsub.s32 %v240, %v242
    %v244 = vrot.slane %v228, %v243
    %v246 = vunpack.c.l.s4 1966171168
    %v247 = vunpack.c.0.s8 %v246
    %v248 = vlaneseq
    %v249 = vshrl.u32 %v248, 7
    %v250 = vsub.s32 %v247, %v249
    %v251 = vrot.slane %v229, %v250
    %v253 = vunpack.c.l.s4 1966171168
    %v254 = vunpack.c.0.s8 %v253
    %v255 = vlaneseq
    %v256 = vshrl.u32 %v255, 7
    %v257 = vsub.s32 %v254, %v256
    %v258 = vrot.slane %v230, %v257
    %v259 = vcombine.high %v237, %v237
    %v260 = vcombine.high %v244, %v244
    %v261 = vcombine.high %v251, %v251
    %v262 = vcombine.high %v258, %v258
    %vm271 = vcmask 57344
    %272 = vst.msk [vmem:[#allocation2] sm:$0x1] %vm271, %v237
    %273 = vst.msk [vmem:[#allocation2 + $0x1] sm:$0x1] %vm271, %v251
    %274 = vst.msk [vmem:[#allocation2 + $0x2] sm:$0x1] %vm271, %v259
    %275 = vst.msk [vmem:[#allocation2 + $0x3] sm:$0x1] %vm271, %v261
    %276 = vst.msk [vmem:[#allocation2 + $0x4] sm:$0x1] %vm271, %v244
    %277 = vst.msk [vmem:[#allocation2 + $0x5] sm:$0x1] %vm271, %v258
    %278 = vst.msk [vmem:[#allocation2 + $0x6] sm:$0x1] %vm271, %v260
    %279 = vst.msk [vmem:[#allocation2 + $0x7] sm:$0x1] %vm271, %v262
    // Predicated region
    $region22: #{tpu_custom_call.1} parent=1 // pred_check
      _
    $region23: #{tpu_custom_call.1} parent=1 // pred_check_branch
      %281 = sbr.rel (0) target = $region25
    $region24: #{tpu_custom_call.1} parent=1 // pred_region
      %s283 = ssub.s32 128, 16
      %284 = vsyncadd [#allocation3], %s283
      %s285 = sshll.u32 [#allocation2], 4
      %s286 = int_to_ptr.vmem [resolvable:$true] %s285
      %291 = dma.vmem_to_hbm [thread:$0]  %s286, 16, %s5, [#allocation3], 16, 16, 1
    $region25: #{tpu_custom_call.1} parent=1 // pred_fallthru
      _
    // Predicated region
    $region26: #{tpu_custom_call.1} parent=1 // pred_check
      _
    $region27: #{tpu_custom_call.1} parent=1 // pred_check_branch
      %293 = sbr.rel (0) target = $region29
    $region28: #{tpu_custom_call.1} parent=1 // pred_region
      %294 = dma.done [#allocation3], 128
    $region29: #{tpu_custom_call.1} parent=1 // pred_fallthru
      _
    %295 = vsyncpa [#allocation3], 1

</llo_original>
